<compile_context>
chip_gen: v7x
topology: tpu7x:2x2x1
jax: 0.10.0
libtpu: 0.0.40
codegen_flags: <defaults>
</compile_context>

<pallas_src>
import jax
import jax.numpy as jnp
from jax import lax
from jax.experimental import pallas as pl
from jax.experimental.pallas import tpu as pltpu


HIDDEN = 32
EMB_DIM = 32
OUT_DIM = 9
LANES = 128


def _round_up(x, m):
    return ((x + m - 1) // m) * m


def rnn_forward(tokens, emb, wih, whh, bih, bhh, wlin, blin, h0):
    S = int(tokens.shape[0])
    V = int(emb.shape[0])

    # ---- Slab row layout (all offsets static Python ints) ------------------
    v_rows = _round_up(V, 8)
    r_whh = v_rows                # rows [r_whh, r_whh+128): W_hh^T, zero-padded
    r_wlin = r_whh + LANES        # rows [r_wlin, r_wlin+128): W_lin^T, zero-padded
    r_blin = r_wlin + LANES       # row r_blin: b_lin (9 lanes, rest 0)
    r_h0 = r_blin + 8             # row r_h0:   h_0   (32 lanes, rest 0)
    n_rows = r_h0 + 8             # = 288 for V=16 (multiple of 8)

    # ---- Weight preprocessing (once per weight set, not per-token work) ----
    # Fused table: emb @ W_ih^T + (b_ih + b_hh).  Row 0 == biases only since
    # embedding row 0 is zero (padding_idx=0), matching torch semantics.
    table = (emb @ wih.T + (bih + bhh)).astype(jnp.float32)            # (V, H)
    slab = jnp.zeros((n_rows, LANES), jnp.float32)
    slab = slab.at[:V, :HIDDEN].set(table)
    slab = slab.at[r_whh:r_whh + HIDDEN, :HIDDEN].set(whh.T.astype(jnp.float32))
    slab = slab.at[r_wlin:r_wlin + HIDDEN, :OUT_DIM].set(wlin.T.astype(jnp.float32))
    slab = slab.at[r_blin, :OUT_DIM].set(blin.astype(jnp.float32))
    slab = slab.at[r_h0, :HIDDEN].set(h0.reshape(-1).astype(jnp.float32))

    # Clamp tokens so a stray out-of-range id can never read past the table
    # rows of the slab (no runtime OOB check on VMEM refs).
    tok = jnp.clip(tokens.astype(jnp.int32), 0, V - 1)                 # (S,)

    def kernel(tok_ref, slab_ref, out_ref):
        # Static carve-outs of the packed slab (zero-cost ref views + loads).
        whh_t = slab_ref[r_whh:r_whh + LANES, :]                       # (128,128)
        h = slab_ref[r_h0:r_h0 + 1, :]                                 # (1,128)

        # Gather the S fused input rows up front (scalar-indexed dynamic row
        # loads, independent of the recurrence -> off the dependent chain).
        xw = [slab_ref[pl.ds(tok_ref[t], 1), :] for t in range(S)]     # S x (1,128)

        # Sequential tanh recurrence, statically unrolled, all in vregs:
        #   h_t = tanh(xw_t + h_{t-1} @ W_hh^T)
        # Padding lanes 32:128 stay exactly 0 (zero columns in whh_t, zero
        # lanes in xw_t, tanh(0)=0), so they never pollute the real lanes.
        hs = []
        for _t in range(S):
            pre = xw[_t] + jnp.dot(h, whh_t, preferred_element_type=jnp.float32)
            h = jnp.tanh(pre)                                          # (1,128)
            hs.append(h)
        h_all = jnp.concatenate(hs, axis=0)                            # (S,128)

        # Output head: relu(H_all @ W_lin^T + b_lin), lane-dense (S,128) store.
        wlin_t = slab_ref[r_wlin:r_wlin + LANES, :]                    # (128,128)
        b = slab_ref[r_blin:r_blin + 1, :]                             # (1,128)
        out = jnp.dot(h_all, wlin_t, preferred_element_type=jnp.float32) + b
        out_ref[...] = jnp.maximum(out, 0.0)

    smem_spec = pl.BlockSpec(memory_space=pltpu.MemorySpace.SMEM)
    vmem_spec = pl.BlockSpec(memory_space=pltpu.MemorySpace.VMEM)
    out_padded = pl.pallas_call(
        kernel,
        out_shape=jax.ShapeDtypeStruct((S, LANES), jnp.float32),
        in_specs=[smem_spec, vmem_spec],
        out_specs=vmem_spec,
    )(tok, slab)

    return out_padded[:, :OUT_DIM]                                     # (S, 9)


def rnn_reference(tokens, emb, wih, whh, bih, bhh, wlin, blin, h0):
    """Pure-JAX reference matching torch semantics (for verification)."""
    x = emb[tokens]                                                    # (S, E)

    def step(h, x_t):
        h_new = jnp.tanh(x_t @ wih.T + bih + h @ whh.T + bhh)
        return h_new, h_new

    _, hs = lax.scan(step, h0[0], x)                                   # (S, H)
    out = hs @ wlin.T + blin
    return jnp.maximum(out, 0.0)


if __name__ == "__main__":
    key = jax.random.PRNGKey(0)
    ks = jax.random.split(key, 10)

    vocab_size = 16
    seq_len = 8

    # Deterministic "synthetic checkpoint" parameter init (PyTorch-like scales).
    emb = jax.random.normal(ks[0], (vocab_size, EMB_DIM), jnp.float32)
    emb = emb.at[0].set(0.0)                                           # padding_idx=0
    scale_rnn = 1.0 / jnp.sqrt(HIDDEN)
    wih = jax.random.uniform(ks[1], (HIDDEN, EMB_DIM), jnp.float32, -scale_rnn, scale_rnn)
    whh = jax.random.uniform(ks[2], (HIDDEN, HIDDEN), jnp.float32, -scale_rnn, scale_rnn)
    bih = jax.random.uniform(ks[3], (HIDDEN,), jnp.float32, -scale_rnn, scale_rnn)
    bhh = jax.random.uniform(ks[4], (HIDDEN,), jnp.float32, -scale_rnn, scale_rnn)
    scale_lin = 1.0 / jnp.sqrt(HIDDEN)
    wlin = jax.random.uniform(ks[5], (OUT_DIM, HIDDEN), jnp.float32, -scale_lin, scale_lin)
    blin = jax.random.uniform(ks[6], (OUT_DIM,), jnp.float32, -scale_lin, scale_lin)

    # h_0 = torch.rand(1, hidden) -> deterministic uniform[0,1) here.
    h0 = jax.random.uniform(ks[7], (1, HIDDEN), jnp.float32)

    # Input token sequence (include a padding token 0).
    inp_seq = jax.random.randint(ks[8], (seq_len,), 0, vocab_size, jnp.int32)
    inp_seq = inp_seq.at[-1].set(0)

    out = rnn_forward(inp_seq, emb, wih, whh, bih, bhh, wlin, blin, h0)
    out = jax.block_until_ready(out)

    ref = rnn_reference(inp_seq, emb, wih, whh, bih, bhh, wlin, blin, h0)
    assert out.shape == (seq_len, OUT_DIM)
    # Slightly loosened vs 1e-5: the fused table reassociates the bias adds.
    assert jnp.allclose(out, ref, atol=1e-4, rtol=1e-4), "mismatch vs reference"

    print("KERNEL_OK")
</pallas_src>

<mosaic_0001>
module attributes {stable_mosaic.version = 11 : i64} {
  func.func @kernel(%arg0: memref<8xi32, #tpu.memory_space<smem>>, %arg1: memref<288x128xf32, #tpu.memory_space<vmem>>, %arg2: memref<8x128xf32, #tpu.memory_space<vmem>>) attributes {dimension_semantics = [], scalar_prefetch = 0 : i64, scratch_operands = 0 : i64, tpu.core_type = #tpu.core_type<tc>} {
    %c16 = arith.constant 16 : index
    %c0 = arith.constant 0 : index
    %0 = vector.load %arg1[%c16, %c0] : memref<288x128xf32, #tpu.memory_space<vmem>>, vector<128x128xf32>
    %c280 = arith.constant 280 : index
    %c0_0 = arith.constant 0 : index
    %1 = vector.load %arg1[%c280, %c0_0] : memref<288x128xf32, #tpu.memory_space<vmem>>, vector<1x128xf32>
    %c0_1 = arith.constant 0 : index
    %2 = memref.load %arg0[%c0_1] : memref<8xi32, #tpu.memory_space<smem>>
    %3 = arith.index_cast %2 : i32 to index
    %c0_2 = arith.constant 0 : index
    %4 = vector.load %arg1[%3, %c0_2] : memref<288x128xf32, #tpu.memory_space<vmem>>, vector<1x128xf32>
    %c1 = arith.constant 1 : index
    %5 = memref.load %arg0[%c1] : memref<8xi32, #tpu.memory_space<smem>>
    %6 = arith.index_cast %5 : i32 to index
    %c0_3 = arith.constant 0 : index
    %7 = vector.load %arg1[%6, %c0_3] : memref<288x128xf32, #tpu.memory_space<vmem>>, vector<1x128xf32>
    %c2 = arith.constant 2 : index
    %8 = memref.load %arg0[%c2] : memref<8xi32, #tpu.memory_space<smem>>
    %9 = arith.index_cast %8 : i32 to index
    %c0_4 = arith.constant 0 : index
    %10 = vector.load %arg1[%9, %c0_4] : memref<288x128xf32, #tpu.memory_space<vmem>>, vector<1x128xf32>
    %c3 = arith.constant 3 : index
    %11 = memref.load %arg0[%c3] : memref<8xi32, #tpu.memory_space<smem>>
    %12 = arith.index_cast %11 : i32 to index
    %c0_5 = arith.constant 0 : index
    %13 = vector.load %arg1[%12, %c0_5] : memref<288x128xf32, #tpu.memory_space<vmem>>, vector<1x128xf32>
    %c4 = arith.constant 4 : index
    %14 = memref.load %arg0[%c4] : memref<8xi32, #tpu.memory_space<smem>>
    %15 = arith.index_cast %14 : i32 to index
    %c0_6 = arith.constant 0 : index
    %16 = vector.load %arg1[%15, %c0_6] : memref<288x128xf32, #tpu.memory_space<vmem>>, vector<1x128xf32>
    %c5 = arith.constant 5 : index
    %17 = memref.load %arg0[%c5] : memref<8xi32, #tpu.memory_space<smem>>
    %18 = arith.index_cast %17 : i32 to index
    %c0_7 = arith.constant 0 : index
    %19 = vector.load %arg1[%18, %c0_7] : memref<288x128xf32, #tpu.memory_space<vmem>>, vector<1x128xf32>
    %c6 = arith.constant 6 : index
    %20 = memref.load %arg0[%c6] : memref<8xi32, #tpu.memory_space<smem>>
    %21 = arith.index_cast %20 : i32 to index
    %c0_8 = arith.constant 0 : index
    %22 = vector.load %arg1[%21, %c0_8] : memref<288x128xf32, #tpu.memory_space<vmem>>, vector<1x128xf32>
    %c7 = arith.constant 7 : index
    %23 = memref.load %arg0[%c7] : memref<8xi32, #tpu.memory_space<smem>>
    %24 = arith.index_cast %23 : i32 to index
    %c0_9 = arith.constant 0 : index
    %25 = vector.load %arg1[%24, %c0_9] : memref<288x128xf32, #tpu.memory_space<vmem>>, vector<1x128xf32>
    %cst = arith.constant dense<0.000000e+00> : vector<1x128xf32>
    %26 = tpu.matmul %1, %0, %cst {dimension_numbers = #tpu.dot_dimension_numbers<[1], [0], [0], [1], [0, 0, 1, 1], [], []>} : vector<1x128xf32>, vector<128x128xf32>, vector<1x128xf32> -> vector<1x128xf32>
    %27 = arith.addf %4, %26 : vector<1x128xf32>
    %28 = math.tanh %27 : vector<1x128xf32>
    %cst_10 = arith.constant dense<0.000000e+00> : vector<1x128xf32>
    %29 = tpu.matmul %28, %0, %cst_10 {dimension_numbers = #tpu.dot_dimension_numbers<[1], [0], [0], [1], [0, 0, 1, 1], [], []>} : vector<1x128xf32>, vector<128x128xf32>, vector<1x128xf32> -> vector<1x128xf32>
    %30 = arith.addf %7, %29 : vector<1x128xf32>
    %31 = math.tanh %30 : vector<1x128xf32>
    %cst_11 = arith.constant dense<0.000000e+00> : vector<1x128xf32>
    %32 = tpu.matmul %31, %0, %cst_11 {dimension_numbers = #tpu.dot_dimension_numbers<[1], [0], [0], [1], [0, 0, 1, 1], [], []>} : vector<1x128xf32>, vector<128x128xf32>, vector<1x128xf32> -> vector<1x128xf32>
    %33 = arith.addf %10, %32 : vector<1x128xf32>
    %34 = math.tanh %33 : vector<1x128xf32>
    %cst_12 = arith.constant dense<0.000000e+00> : vector<1x128xf32>
    %35 = tpu.matmul %34, %0, %cst_12 {dimension_numbers = #tpu.dot_dimension_numbers<[1], [0], [0], [1], [0, 0, 1, 1], [], []>} : vector<1x128xf32>, vector<128x128xf32>, vector<1x128xf32> -> vector<1x128xf32>
    %36 = arith.addf %13, %35 : vector<1x128xf32>
    %37 = math.tanh %36 : vector<1x128xf32>
    %cst_13 = arith.constant dense<0.000000e+00> : vector<1x128xf32>
    %38 = tpu.matmul %37, %0, %cst_13 {dimension_numbers = #tpu.dot_dimension_numbers<[1], [0], [0], [1], [0, 0, 1, 1], [], []>} : vector<1x128xf32>, vector<128x128xf32>, vector<1x128xf32> -> vector<1x128xf32>
    %39 = arith.addf %16, %38 : vector<1x128xf32>
    %40 = math.tanh %39 : vector<1x128xf32>
    %cst_14 = arith.constant dense<0.000000e+00> : vector<1x128xf32>
    %41 = tpu.matmul %40, %0, %cst_14 {dimension_numbers = #tpu.dot_dimension_numbers<[1], [0], [0], [1], [0, 0, 1, 1], [], []>} : vector<1x128xf32>, vector<128x128xf32>, vector<1x128xf32> -> vector<1x128xf32>
    %42 = arith.addf %19, %41 : vector<1x128xf32>
    %43 = math.tanh %42 : vector<1x128xf32>
    %cst_15 = arith.constant dense<0.000000e+00> : vector<1x128xf32>
    %44 = tpu.matmul %43, %0, %cst_15 {dimension_numbers = #tpu.dot_dimension_numbers<[1], [0], [0], [1], [0, 0, 1, 1], [], []>} : vector<1x128xf32>, vector<128x128xf32>, vector<1x128xf32> -> vector<1x128xf32>
    %45 = arith.addf %22, %44 : vector<1x128xf32>
    %46 = math.tanh %45 : vector<1x128xf32>
    %cst_16 = arith.constant dense<0.000000e+00> : vector<1x128xf32>
    %47 = tpu.matmul %46, %0, %cst_16 {dimension_numbers = #tpu.dot_dimension_numbers<[1], [0], [0], [1], [0, 0, 1, 1], [], []>} : vector<1x128xf32>, vector<128x128xf32>, vector<1x128xf32> -> vector<1x128xf32>
    %48 = arith.addf %25, %47 : vector<1x128xf32>
    %49 = math.tanh %48 : vector<1x128xf32>
    %50 = tpu.concatenate %28, %31, %34, %37, %40, %43, %46, %49 in 0 : vector<1x128xf32>, vector<1x128xf32>, vector<1x128xf32>, vector<1x128xf32>, vector<1x128xf32>, vector<1x128xf32>, vector<1x128xf32>, vector<1x128xf32> -> vector<8x128xf32>
    %c144 = arith.constant 144 : index
    %c0_17 = arith.constant 0 : index
    %51 = vector.load %arg1[%c144, %c0_17] : memref<288x128xf32, #tpu.memory_space<vmem>>, vector<128x128xf32>
    %c272 = arith.constant 272 : index
    %c0_18 = arith.constant 0 : index
    %52 = vector.load %arg1[%c272, %c0_18] : memref<288x128xf32, #tpu.memory_space<vmem>>, vector<1x128xf32>
    %cst_19 = arith.constant dense<0.000000e+00> : vector<8x128xf32>
    %53 = tpu.matmul %50, %51, %cst_19 {dimension_numbers = #tpu.dot_dimension_numbers<[1], [0], [0], [1], [0, 0, 1, 1], [], []>} : vector<8x128xf32>, vector<128x128xf32>, vector<8x128xf32> -> vector<8x128xf32>
    %54 = vector.broadcast %52 : vector<1x128xf32> to vector<8x128xf32>
    %55 = arith.addf %53, %54 : vector<8x128xf32>
    %cst_20 = arith.constant 0.000000e+00 : f32
    %56 = vector.broadcast %cst_20 : f32 to vector<8x128xf32>
    %57 = arith.maximumf %55, %56 : vector<8x128xf32>
    %c0_21 = arith.constant 0 : index
    %c0_22 = arith.constant 0 : index
    %58 = vector.load %arg2[%c0_21, %c0_22] : memref<8x128xf32, #tpu.memory_space<vmem>>, vector<8x128xf32>
    tpu.vector_store %arg2[%c0_21, %c0_22], %57 {strides = array<i32>} : memref<8x128xf32, #tpu.memory_space<vmem>>, vector<8x128xf32>,
    return
  }
}

</mosaic_0001>

<llo_original>
// kernel: tpu_custom_call.1
$region0: #{tpu_custom_call.1}
  #allocation0 [shape = 'u32[]', space=smem, size = 0x4, offset = 0x4, fixed_abs, tag = 'smem constant byte address 0x4 - core index']
  #allocation1 [shape = 'u32[144,128]{1,0:T(1,128)}', space=vmem, size = 0x12000, scoped, tag = 'internal scratch']
  %s0 = inlined_call_operand.hbm [shape: s32[8], index: 0, kind: input, shape index: {}]
  %s1 = inlined_call_operand.hbm [shape: f32[288,128], index: 1, kind: input, shape index: {}]
  %s2 = inlined_call_operand.hbm [shape: f32[8,128], index: 2, kind: output, shape index: {}]
  %s3 = sld [smem:[#allocation0]]
  $region26: #{tpu_custom_call.1} parent=0
    _
  %s5 = ssub.s32 1, %s3
  %s6 = scalar_select 0, %s5, %s3
  $region1: #{tpu_custom_call.1} parent=0
    #allocation2 [shape = 'u8[512]{0}', space=smem, size = 0x200, scoped, tag = 'input window, operand 0, single buffered']
    #allocation3 [shape = 's32[1]{0}', space=sflag, size = 0x4, scoped, tag = 'scoped memory for tpu_custom_call.1']
    #allocation4 [shape = 's32[1]{0}', space=sflag, size = 0x4, scoped, tag = 'scoped memory for tpu_custom_call.1']
    #allocation5 [shape = 's32[1]{0}', space=sflag, size = 0x4, scoped, tag = 'scoped memory for tpu_custom_call.1']
    #allocation6 [shape = 'u8[147456]{0}', space=vmem, size = 0x24000, scoped, tag = 'input window, operand 1, single buffered']
    #allocation7 [shape = 'u8[4096]{0}', space=vmem, size = 0x1000, scoped, tag = 'output window, operand 0, single buffered']
    %7 = vsyncpa [#allocation5], 0
    %8 = vsyncpa [#allocation3], 0
    %9 = vsyncpa [#allocation4], 0
    // Predicated region
    $region2: #{tpu_custom_call.1} parent=1 // pred_check
      _
    $region3: #{tpu_custom_call.1} parent=1 // pred_check_branch
      %11 = sbr.rel (0) target = $region5
    $region4: #{tpu_custom_call.1} parent=1 // pred_region
      %s13 = ssub.s32 16, 16
      %14 = vsyncadd [#allocation5], %s13
      %17 = dma.hbm_to_smem %s0, 16, [#allocation2], [#allocation5]
    $region5: #{tpu_custom_call.1} parent=1 // pred_fallthru
      _
    // Predicated region
    $region6: #{tpu_custom_call.1} parent=1 // pred_check
      _
    $region7: #{tpu_custom_call.1} parent=1 // pred_check_branch
      %19 = sbr.rel (0) target = $region9
    $region8: #{tpu_custom_call.1} parent=1 // pred_region
      %s21 = ssub.s32 4608, 4608
      %22 = vsyncadd [#allocation3], %s21
      %s23 = sshll.u32 [#allocation6], 4
      %s24 = int_to_ptr.vmem [resolvable:$true] %s23
      %29 = dma.hbm_to_vmem [thread:$0]  %s1, 4608, %s24, [#allocation3], 128, 128, 8
    $region9: #{tpu_custom_call.1} parent=1 // pred_fallthru
      _
    // Predicated region
    $region10: #{tpu_custom_call.1} parent=1 // pred_check
      _
    $region11: #{tpu_custom_call.1} parent=1 // pred_check_branch
      %31 = sbr.rel (0) target = $region13
    $region12: #{tpu_custom_call.1} parent=1 // pred_region
      %32 = dma.done [#allocation5], 16
    $region13: #{tpu_custom_call.1} parent=1 // pred_fallthru
      _
    // Predicated region
    $region14: #{tpu_custom_call.1} parent=1 // pred_check
      _
    $region15: #{tpu_custom_call.1} parent=1 // pred_check_branch
      %34 = sbr.rel (0) target = $region17
    $region16: #{tpu_custom_call.1} parent=1 // pred_region
      %35 = dma.done [#allocation3], 4608
    $region17: #{tpu_custom_call.1} parent=1 // pred_fallthru
      _
    %36 = sfence
    %v37 = vld [vmem:[#allocation6 + $0x10] sm:$0xff]
    %v38 = vld [vmem:[#allocation6 + $0x18] sm:$0xff]
    %v39 = vld [vmem:[#allocation6 + $0x20] sm:$0xff]
    %v40 = vld [vmem:[#allocation6 + $0x28] sm:$0xff]
    %v41 = vld [vmem:[#allocation6 + $0x30] sm:$0xff]
    %v42 = vld [vmem:[#allocation6 + $0x38] sm:$0xff]
    %v43 = vld [vmem:[#allocation6 + $0x40] sm:$0xff]
    %v44 = vld [vmem:[#allocation6 + $0x48] sm:$0xff]
    %v45 = vld [vmem:[#allocation6 + $0x50] sm:$0xff]
    %v46 = vld [vmem:[#allocation6 + $0x58] sm:$0xff]
    %v47 = vld [vmem:[#allocation6 + $0x60] sm:$0xff]
    %v48 = vld [vmem:[#allocation6 + $0x68] sm:$0xff]
    %v49 = vld [vmem:[#allocation6 + $0x70] sm:$0xff]
    %v50 = vld [vmem:[#allocation6 + $0x78] sm:$0xff]
    %v51 = vld [vmem:[#allocation6 + $0x80] sm:$0xff]
    %v52 = vld [vmem:[#allocation6 + $0x88] sm:$0xff]
    %v53 = vld [vmem:[#allocation6 + $0x118] sm:$0x1]
    %s54 = sld [smem:[#allocation2]]
    %s55 = scalar_lea.vmem [#allocation6], %s54
    %v56 = vld [vmem:[%s55] sm:$0x1]
    %s57 = sld [smem:[#allocation2 + $0x1]]
    %s58 = scalar_lea.vmem [#allocation6], %s57
    %v59 = vld [vmem:[%s58] sm:$0x1]
    %s60 = sld [smem:[#allocation2 + $0x2]]
    %s61 = scalar_lea.vmem [#allocation6], %s60
    %v62 = vld [vmem:[%s61] sm:$0x1]
    %s63 = sld [smem:[#allocation2 + $0x3]]
    %s64 = scalar_lea.vmem [#allocation6], %s63
    %v65 = vld [vmem:[%s64] sm:$0x1]
    %s66 = sld [smem:[#allocation2 + $0x4]]
    %s67 = scalar_lea.vmem [#allocation6], %s66
    %v68 = vld [vmem:[%s67] sm:$0x1]
    %s69 = sld [smem:[#allocation2 + $0x5]]
    %s70 = scalar_lea.vmem [#allocation6], %s69
    %v71 = vld [vmem:[%s70] sm:$0x1]
    %s72 = sld [smem:[#allocation2 + $0x6]]
    %s73 = scalar_lea.vmem [#allocation6], %s72
    %v74 = vld [vmem:[%s73] sm:$0x1]
    %s75 = sld [smem:[#allocation2 + $0x7]]
    %s76 = scalar_lea.vmem [#allocation6], %s75
    %v77 = vld [vmem:[%s76] sm:$0x1]
    %78 = vmatprep.subr.mxu0 0.0
    %79 = vmatpush1.msra.mxu0 %v37
    %80 = vmatprep.subr.mxu0 0.0
    %81 = vmatpush1.msra.mxu0 %v38
    %82 = vmatprep.subr.mxu0 0.0
    %83 = vmatpush1.msra.mxu0 %v39
    %84 = vmatprep.subr.mxu0 0.0
    %85 = vmatpush1.msra.mxu0 %v40
    %86 = vmatprep.subr.mxu0 0.0
    %87 = vmatpush1.msra.mxu0 %v41
    %88 = vmatprep.subr.mxu0 0.0
    %89 = vmatpush1.msra.mxu0 %v42
    %90 = vmatprep.subr.mxu0 0.0
    %91 = vmatpush1.msra.mxu0 %v43
    %92 = vmatprep.subr.mxu0 0.0
    %93 = vmatpush1.msra.mxu0 %v44
    %94 = vmatprep.subr.mxu0 0.0
    %95 = vmatpush1.msra.mxu0 %v45
    %96 = vmatprep.subr.mxu0 0.0
    %97 = vmatpush1.msra.mxu0 %v46
    %98 = vmatprep.subr.mxu0 0.0
    %99 = vmatpush1.msra.mxu0 %v47
    %100 = vmatprep.subr.mxu0 0.0
    %101 = vmatpush1.msra.mxu0 %v48
    %102 = vmatprep.subr.mxu0 0.0
    %103 = vmatpush1.msra.mxu0 %v49
    %104 = vmatprep.subr.mxu0 0.0
    %105 = vmatpush1.msra.mxu0 %v50
    %106 = vmatprep.subr.mxu0 0.0
    %107 = vmatpush1.msra.mxu0 %v51
    %108 = vmatprep.subr.mxu0 0.0
    %109 = vmatpush1.msra.mxu0 %v52
    %110 = vmatprep.subr.mxu0 0.0
    %111 = vmatpush1.msra.mxu0 0.0
    %112 = vmatprep.subr.mxu0 0.0
    %113 = vmatpush1.msra.mxu0 0.0
    %114 = vmatprep.subr.mxu0 0.0
    %115 = vmatpush1.msra.mxu0 0.0
    %116 = vmatprep.subr.mxu0 0.0
    %117 = vmatpush1.msra.mxu0 0.0
    %118 = vmatprep.subr.mxu0 0.0
    %119 = vmatpush1.msra.mxu0 0.0
    %120 = vmatprep.subr.mxu0 0.0
    %121 = vmatpush1.msra.mxu0 0.0
    %122 = vmatprep.subr.mxu0 0.0
    %123 = vmatpush1.msra.mxu0 0.0
    %124 = vmatprep.subr.mxu0 0.0
    %125 = vmatpush1.msra.mxu0 0.0
    %126 = vmatprep.subr.mxu0 0.0
    %127 = vmatpush1.msra.mxu0 0.0
    %128 = vmatprep.subr.mxu0 0.0
    %129 = vmatpush1.msra.mxu0 0.0
    %130 = vmatprep.subr.mxu0 0.0
    %131 = vmatpush1.msra.mxu0 0.0
    %132 = vmatprep.subr.mxu0 0.0
    %133 = vmatpush1.msra.mxu0 0.0
    %134 = vmatprep.subr.mxu0 0.0
    %135 = vmatpush1.msra.mxu0 0.0
    %136 = vmatprep.subr.mxu0 0.0
    %137 = vmatpush1.msra.mxu0 0.0
    %138 = vmatprep.subr.mxu0 0.0
    %139 = vmatpush1.msra.mxu0 0.0
    %140 = vmatprep.subr.mxu0 0.0
    %141 = vmatpush1.msra.mxu0 0.0
    %142 = vmatprep.mubr.f32.mxu0 0.0
    %143 = vmatmul.mubr.f32.gmra.mrb[0].mxu0 %v53
    %v144 = vpop.f32.mrb[0].mxu0
    %v145 = vadd.f32 0.0, %v144
    %v146 = vpop.f32.mrb[0].mxu0
    %147 = vdwg.mxu0
    %v148 = vadd.f32 %v56, %v145
    %v149 = vtanh.pop %v148
    %150 = vmatprep.subr.mxu0 0.0
    %151 = vmatpush1.msra.mxu0 %v37
    %152 = vmatprep.subr.mxu0 0.0
    %153 = vmatpush1.msra.mxu0 %v38
    %154 = vmatprep.subr.mxu0 0.0
    %155 = vmatpush1.msra.mxu0 %v39
    %156 = vmatprep.subr.mxu0 0.0
    %157 = vmatpush1.msra.mxu0 %v40
    %158 = vmatprep.subr.mxu0 0.0
    %159 = vmatpush1.msra.mxu0 %v41
    %160 = vmatprep.subr.mxu0 0.0
    %161 = vmatpush1.msra.mxu0 %v42
    %162 = vmatprep.subr.mxu0 0.0
    %163 = vmatpush1.msra.mxu0 %v43
    %164 = vmatprep.subr.mxu0 0.0
    %165 = vmatpush1.msra.mxu0 %v44
    %166 = vmatprep.subr.mxu0 0.0
    %167 = vmatpush1.msra.mxu0 %v45
    %168 = vmatprep.subr.mxu0 0.0
    %169 = vmatpush1.msra.mxu0 %v46
    %170 = vmatprep.subr.mxu0 0.0
    %171 = vmatpush1.msra.mxu0 %v47
    %172 = vmatprep.subr.mxu0 0.0
    %173 = vmatpush1.msra.mxu0 %v48
    %174 = vmatprep.subr.mxu0 0.0
    %175 = vmatpush1.msra.mxu0 %v49
    %176 = vmatprep.subr.mxu0 0.0
    %177 = vmatpush1.msra.mxu0 %v50
    %178 = vmatprep.subr.mxu0 0.0
    %179 = vmatpush1.msra.mxu0 %v51
    %180 = vmatprep.subr.mxu0 0.0
    %181 = vmatpush1.msra.mxu0 %v52
    %182 = vmatprep.subr.mxu0 0.0
    %183 = vmatpush1.msra.mxu0 0.0
    %184 = vmatprep.subr.mxu0 0.0
    %185 = vmatpush1.msra.mxu0 0.0
    %186 = vmatprep.subr.mxu0 0.0
    %187 = vmatpush1.msra.mxu0 0.0
    %188 = vmatprep.subr.mxu0 0.0
    %189 = vmatpush1.msra.mxu0 0.0
    %190 = vmatprep.subr.mxu0 0.0
    %191 = vmatpush1.msra.mxu0 0.0
    %192 = vmatprep.subr.mxu0 0.0
    %193 = vmatpush1.msra.mxu0 0.0
    %194 = vmatprep.subr.mxu0 0.0
    %195 = vmatpush1.msra.mxu0 0.0
    %196 = vmatprep.subr.mxu0 0.0
    %197 = vmatpush1.msra.mxu0 0.0
    %198 = vmatprep.subr.mxu0 0.0
    %199 = vmatpush1.msra.mxu0 0.0
    %200 = vmatprep.subr.mxu0 0.0
    %201 = vmatpush1.msra.mxu0 0.0
    %202 = vmatprep.subr.mxu0 0.0
    %203 = vmatpush1.msra.mxu0 0.0
    %204 = vmatprep.subr.mxu0 0.0
    %205 = vmatpush1.msra.mxu0 0.0
    %206 = vmatprep.subr.mxu0 0.0
    %207 = vmatpush1.msra.mxu0 0.0
    %208 = vmatprep.subr.mxu0 0.0
    %209 = vmatpush1.msra.mxu0 0.0
    %210 = vmatprep.subr.mxu0 0.0
    %211 = vmatpush1.msra.mxu0 0.0
    %212 = vmatprep.subr.mxu0 0.0
    %213 = vmatpush1.msra.mxu0 0.0
    %214 = vmatprep.mubr.f32.mxu0 0.0
    %215 = vmatmul.mubr.f32.gmra.mrb[0].mxu0 %v149
    %v216 = vpop.f32.mrb[0].mxu0
    %v217 = vadd.f32 0.0, %v216
    %v218 = vpop.f32.mrb[0].mxu0
    %219 = vdwg.mxu0
    %v220 = vadd.f32 %v59, %v217
    %v221 = vtanh.pop %v220
    %222 = vmatprep.subr.mxu0 0.0
    %223 = vmatpush1.msra.mxu0 %v37
    %224 = vmatprep.subr.mxu0 0.0
    %225 = vmatpush1.msra.mxu0 %v38
    %226 = vmatprep.subr.mxu0 0.0
    %227 = vmatpush1.msra.mxu0 %v39
    %228 = vmatprep.subr.mxu0 0.0
    %229 = vmatpush1.msra.mxu0 %v40
    %230 = vmatprep.subr.mxu0 0.0
    %231 = vmatpush1.msra.mxu0 %v41
    %232 = vmatprep.subr.mxu0 0.0
    %233 = vmatpush1.msra.mxu0 %v42
    %234 = vmatprep.subr.mxu0 0.0
    %235 = vmatpush1.msra.mxu0 %v43
    %236 = vmatprep.subr.mxu0 0.0
    %237 = vmatpush1.msra.mxu0 %v44
    %238 = vmatprep.subr.mxu0 0.0
    %239 = vmatpush1.msra.mxu0 %v45
    %240 = vmatprep.subr.mxu0 0.0
    %241 = vmatpush1.msra.mxu0 %v46
    %242 = vmatprep.subr.mxu0 0.0
    %243 = vmatpush1.msra.mxu0 %v47
    %244 = vmatprep.subr.mxu0 0.0
    %245 = vmatpush1.msra.mxu0 %v48
    %246 = vmatprep.subr.mxu0 0.0
    %247 = vmatpush1.msra.mxu0 %v49
    %248 = vmatprep.subr.mxu0 0.0
    %249 = vmatpush1.msra.mxu0 %v50
    %250 = vmatprep.subr.mxu0 0.0
    %251 = vmatpush1.msra.mxu0 %v51
    %252 = vmatprep.subr.mxu0 0.0
    %253 = vmatpush1.msra.mxu0 %v52
    %254 = vmatprep.subr.mxu0 0.0
    %255 = vmatpush1.msra.mxu0 0.0
    %256 = vmatprep.subr.mxu0 0.0
    %257 = vmatpush1.msra.mxu0 0.0
    %258 = vmatprep.subr.mxu0 0.0
    %259 = vmatpush1.msra.mxu0 0.0
    %260 = vmatprep.subr.mxu0 0.0
    %261 = vmatpush1.msra.mxu0 0.0
    %262 = vmatprep.subr.mxu0 0.0
    %263 = vmatpush1.msra.mxu0 0.0
    %264 = vmatprep.subr.mxu0 0.0
    %265 = vmatpush1.msra.mxu0 0.0
    %266 = vmatprep.subr.mxu0 0.0
    %267 = vmatpush1.msra.mxu0 0.0
    %268 = vmatprep.subr.mxu0 0.0
    %269 = vmatpush1.msra.mxu0 0.0
    %270 = vmatprep.subr.mxu0 0.0
    %271 = vmatpush1.msra.mxu0 0.0
    %272 = vmatprep.subr.mxu0 0.0
    %273 = vmatpush1.msra.mxu0 0.0
    %274 = vmatprep.subr.mxu0 0.0
    %275 = vmatpush1.msra.mxu0 0.0
    %276 = vmatprep.subr.mxu0 0.0
    %277 = vmatpush1.msra.mxu0 0.0
    %278 = vmatprep.subr.mxu0 0.0
    %279 = vmatpush1.msra.mxu0 0.0
    %280 = vmatprep.subr.mxu0 0.0
    %281 = vmatpush1.msra.mxu0 0.0
    %282 = vmatprep.subr.mxu0 0.0
    %283 = vmatpush1.msra.mxu0 0.0
    %284 = vmatprep.subr.mxu0 0.0
    %285 = vmatpush1.msra.mxu0 0.0
    %286 = vmatprep.mubr.f32.mxu0 0.0
    %287 = vmatmul.mubr.f32.gmra.mrb[0].mxu0 %v221
    %v288 = vpop.f32.mrb[0].mxu0
    %v289 = vadd.f32 0.0, %v288
    %v290 = vpop.f32.mrb[0].mxu0
    %291 = vdwg.mxu0
    %v292 = vadd.f32 %v62, %v289
    %v293 = vtanh.pop %v292
    %294 = vmatprep.subr.mxu0 0.0
    %295 = vmatpush1.msra.mxu0 %v37
    %296 = vmatprep.subr.mxu0 0.0
    %297 = vmatpush1.msra.mxu0 %v38
    %298 = vmatprep.subr.mxu0 0.0
    %299 = vmatpush1.msra.mxu0 %v39
    %300 = vmatprep.subr.mxu0 0.0
    %301 = vmatpush1.msra.mxu0 %v40
    %302 = vmatprep.subr.mxu0 0.0
    %303 = vmatpush1.msra.mxu0 %v41
    %304 = vmatprep.subr.mxu0 0.0
    %305 = vmatpush1.msra.mxu0 %v42
    %306 = vmatprep.subr.mxu0 0.0
    %307 = vmatpush1.msra.mxu0 %v43
    %308 = vmatprep.subr.mxu0 0.0
    %309 = vmatpush1.msra.mxu0 %v44
    %310 = vmatprep.subr.mxu0 0.0
    %311 = vmatpush1.msra.mxu0 %v45
    %312 = vmatprep.subr.mxu0 0.0
    %313 = vmatpush1.msra.mxu0 %v46
    %314 = vmatprep.subr.mxu0 0.0
    %315 = vmatpush1.msra.mxu0 %v47
    %316 = vmatprep.subr.mxu0 0.0
    %317 = vmatpush1.msra.mxu0 %v48
    %318 = vmatprep.subr.mxu0 0.0
    %319 = vmatpush1.msra.mxu0 %v49
    %320 = vmatprep.subr.mxu0 0.0
    %321 = vmatpush1.msra.mxu0 %v50
    %322 = vmatprep.subr.mxu0 0.0
    %323 = vmatpush1.msra.mxu0 %v51
    %324 = vmatprep.subr.mxu0 0.0
    %325 = vmatpush1.msra.mxu0 %v52
    %326 = vmatprep.subr.mxu0 0.0
    %327 = vmatpush1.msra.mxu0 0.0
    %328 = vmatprep.subr.mxu0 0.0
    %329 = vmatpush1.msra.mxu0 0.0
    %330 = vmatprep.subr.mxu0 0.0
    %331 = vmatpush1.msra.mxu0 0.0
    %332 = vmatprep.subr.mxu0 0.0
    %333 = vmatpush1.msra.mxu0 0.0
    %334 = vmatprep.subr.mxu0 0.0
    %335 = vmatpush1.msra.mxu0 0.0
    %336 = vmatprep.subr.mxu0 0.0
    %337 = vmatpush1.msra.mxu0 0.0
    %338 = vmatprep.subr.mxu0 0.0
    %339 = vmatpush1.msra.mxu0 0.0
    %340 = vmatprep.subr.mxu0 0.0
    %341 = vmatpush1.msra.mxu0 0.0
    %342 = vmatprep.subr.mxu0 0.0
    %343 = vmatpush1.msra.mxu0 0.0
    %344 = vmatprep.subr.mxu0 0.0
    %345 = vmatpush1.msra.mxu0 0.0
    %346 = vmatprep.subr.mxu0 0.0
    %347 = vmatpush1.msra.mxu0 0.0
    %348 = vmatprep.subr.mxu0 0.0
    %349 = vmatpush1.msra.mxu0 0.0
    %350 = vmatprep.subr.mxu0 0.0
    %351 = vmatpush1.msra.mxu0 0.0
    %352 = vmatprep.subr.mxu0 0.0
    %353 = vmatpush1.msra.mxu0 0.0
    %354 = vmatprep.subr.mxu0 0.0
    %355 = vmatpush1.msra.mxu0 0.0
    %356 = vmatprep.subr.mxu0 0.0
    %357 = vmatpush1.msra.mxu0 0.0
    %358 = vmatprep.mubr.f32.mxu0 0.0
    %359 = vmatmul.mubr.f32.gmra.mrb[0].mxu0 %v293
    %v360 = vpop.f32.mrb[0].mxu0
    %v361 = vadd.f32 0.0, %v360
    %v362 = vpop.f32.mrb[0].mxu0
    %363 = vdwg.mxu0
    %v364 = vadd.f32 %v65, %v361
    %v365 = vtanh.pop %v364
    %366 = vmatprep.subr.mxu0 0.0
    %367 = vmatpush1.msra.mxu0 %v37
    %368 = vmatprep.subr.mxu0 0.0
    %369 = vmatpush1.msra.mxu0 %v38
    %370 = vmatprep.subr.mxu0 0.0
    %371 = vmatpush1.msra.mxu0 %v39
    %372 = vmatprep.subr.mxu0 0.0
    %373 = vmatpush1.msra.mxu0 %v40
    %374 = vmatprep.subr.mxu0 0.0
    %375 = vmatpush1.msra.mxu0 %v41
    %376 = vmatprep.subr.mxu0 0.0
    %377 = vmatpush1.msra.mxu0 %v42
    %378 = vmatprep.subr.mxu0 0.0
    %379 = vmatpush1.msra.mxu0 %v43
    %380 = vmatprep.subr.mxu0 0.0
    %381 = vmatpush1.msra.mxu0 %v44
    %382 = vmatprep.subr.mxu0 0.0
    %383 = vmatpush1.msra.mxu0 %v45
    %384 = vmatprep.subr.mxu0 0.0
    %385 = vmatpush1.msra.mxu0 %v46
    %386 = vmatprep.subr.mxu0 0.0
    %387 = vmatpush1.msra.mxu0 %v47
    %388 = vmatprep.subr.mxu0 0.0
    %389 = vmatpush1.msra.mxu0 %v48
    %390 = vmatprep.subr.mxu0 0.0
    %391 = vmatpush1.msra.mxu0 %v49
    %392 = vmatprep.subr.mxu0 0.0
    %393 = vmatpush1.msra.mxu0 %v50
    %394 = vmatprep.subr.mxu0 0.0
    %395 = vmatpush1.msra.mxu0 %v51
    %396 = vmatprep.subr.mxu0 0.0
    %397 = vmatpush1.msra.mxu0 %v52
    %398 = vmatprep.subr.mxu0 0.0
    %399 = vmatpush1.msra.mxu0 0.0
    %400 = vmatprep.subr.mxu0 0.0
    %401 = vmatpush1.msra.mxu0 0.0
    %402 = vmatprep.subr.mxu0 0.0
    %403 = vmatpush1.msra.mxu0 0.0
    %404 = vmatprep.subr.mxu0 0.0
    %405 = vmatpush1.msra.mxu0 0.0
    %406 = vmatprep.subr.mxu0 0.0
    %407 = vmatpush1.msra.mxu0 0.0
    %408 = vmatprep.subr.mxu0 0.0
    %409 = vmatpush1.msra.mxu0 0.0
    %410 = vmatprep.subr.mxu0 0.0
    %411 = vmatpush1.msra.mxu0 0.0
    %412 = vmatprep.subr.mxu0 0.0
    %413 = vmatpush1.msra.mxu0 0.0
    %414 = vmatprep.subr.mxu0 0.0
    %415 = vmatpush1.msra.mxu0 0.0
    %416 = vmatprep.subr.mxu0 0.0
    %417 = vmatpush1.msra.mxu0 0.0
    %418 = vmatprep.subr.mxu0 0.0
    %419 = vmatpush1.msra.mxu0 0.0
    %420 = vmatprep.subr.mxu0 0.0
    %421 = vmatpush1.msra.mxu0 0.0
    %422 = vmatprep.subr.mxu0 0.0
    %423 = vmatpush1.msra.mxu0 0.0
    %424 = vmatprep.subr.mxu0 0.0
    %425 = vmatpush1.msra.mxu0 0.0
    %426 = vmatprep.subr.mxu0 0.0
    %427 = vmatpush1.msra.mxu0 0.0
    %428 = vmatprep.subr.mxu0 0.0
    %429 = vmatpush1.msra.mxu0 0.0
    %430 = vmatprep.mubr.f32.mxu0 0.0
    %431 = vmatmul.mubr.f32.gmra.mrb[0].mxu0 %v365
    %v432 = vpop.f32.mrb[0].mxu0
    %v433 = vadd.f32 0.0, %v432
    %v434 = vpop.f32.mrb[0].mxu0
    %435 = vdwg.mxu0
    %v436 = vadd.f32 %v68, %v433
    %v437 = vtanh.pop %v436
    %438 = vmatprep.subr.mxu0 0.0
    %439 = vmatpush1.msra.mxu0 %v37
    %440 = vmatprep.subr.mxu0 0.0
    %441 = vmatpush1.msra.mxu0 %v38
    %442 = vmatprep.subr.mxu0 0.0
    %443 = vmatpush1.msra.mxu0 %v39
    %444 = vmatprep.subr.mxu0 0.0
    %445 = vmatpush1.msra.mxu0 %v40
    %446 = vmatprep.subr.mxu0 0.0
    %447 = vmatpush1.msra.mxu0 %v41
    %448 = vmatprep.subr.mxu0 0.0
    %449 = vmatpush1.msra.mxu0 %v42
    %450 = vmatprep.subr.mxu0 0.0
    %451 = vmatpush1.msra.mxu0 %v43
    %452 = vmatprep.subr.mxu0 0.0
    %453 = vmatpush1.msra.mxu0 %v44
    %454 = vmatprep.subr.mxu0 0.0
    %455 = vmatpush1.msra.mxu0 %v45
    %456 = vmatprep.subr.mxu0 0.0
    %457 = vmatpush1.msra.mxu0 %v46
    %458 = vmatprep.subr.mxu0 0.0
    %459 = vmatpush1.msra.mxu0 %v47
    %460 = vmatprep.subr.mxu0 0.0
    %461 = vmatpush1.msra.mxu0 %v48
    %462 = vmatprep.subr.mxu0 0.0
    %463 = vmatpush1.msra.mxu0 %v49
    %464 = vmatprep.subr.mxu0 0.0
    %465 = vmatpush1.msra.mxu0 %v50
    %466 = vmatprep.subr.mxu0 0.0
    %467 = vmatpush1.msra.mxu0 %v51
    %468 = vmatprep.subr.mxu0 0.0
    %469 = vmatpush1.msra.mxu0 %v52
    %470 = vmatprep.subr.mxu0 0.0
    %471 = vmatpush1.msra.mxu0 0.0
    %472 = vmatprep.subr.mxu0 0.0
    %473 = vmatpush1.msra.mxu0 0.0
    %474 = vmatprep.subr.mxu0 0.0
    %475 = vmatpush1.msra.mxu0 0.0
    %476 = vmatprep.subr.mxu0 0.0
    %477 = vmatpush1.msra.mxu0 0.0
    %478 = vmatprep.subr.mxu0 0.0
    %479 = vmatpush1.msra.mxu0 0.0
    %480 = vmatprep.subr.mxu0 0.0
    %481 = vmatpush1.msra.mxu0 0.0
    %482 = vmatprep.subr.mxu0 0.0
    %483 = vmatpush1.msra.mxu0 0.0
    %484 = vmatprep.subr.mxu0 0.0
    %485 = vmatpush1.msra.mxu0 0.0
    %486 = vmatprep.subr.mxu0 0.0
    %487 = vmatpush1.msra.mxu0 0.0
    %488 = vmatprep.subr.mxu0 0.0
    %489 = vmatpush1.msra.mxu0 0.0
    %490 = vmatprep.subr.mxu0 0.0
    %491 = vmatpush1.msra.mxu0 0.0
    %492 = vmatprep.subr.mxu0 0.0
    %493 = vmatpush1.msra.mxu0 0.0
    %494 = vmatprep.subr.mxu0 0.0
    %495 = vmatpush1.msra.mxu0 0.0
    %496 = vmatprep.subr.mxu0 0.0
    %497 = vmatpush1.msra.mxu0 0.0
    %498 = vmatprep.subr.mxu0 0.0
    %499 = vmatpush1.msra.mxu0 0.0
    %500 = vmatprep.subr.mxu0 0.0
    %501 = vmatpush1.msra.mxu0 0.0
    %502 = vmatprep.mubr.f32.mxu0 0.0
    %503 = vmatmul.mubr.f32.gmra.mrb[0].mxu0 %v437
    %v504 = vpop.f32.mrb[0].mxu0
    %v505 = vadd.f32 0.0, %v504
    %v506 = vpop.f32.mrb[0].mxu0
    %507 = vdwg.mxu0
    %v508 = vadd.f32 %v71, %v505
    %v509 = vtanh.pop %v508
    %510 = vmatprep.subr.mxu0 0.0
    %511 = vmatpush1.msra.mxu0 %v37
    %512 = vmatprep.subr.mxu0 0.0
    %513 = vmatpush1.msra.mxu0 %v38
    %514 = vmatprep.subr.mxu0 0.0
    %515 = vmatpush1.msra.mxu0 %v39
    %516 = vmatprep.subr.mxu0 0.0
    %517 = vmatpush1.msra.mxu0 %v40
    %518 = vmatprep.subr.mxu0 0.0
    %519 = vmatpush1.msra.mxu0 %v41
    %520 = vmatprep.subr.mxu0 0.0
    %521 = vmatpush1.msra.mxu0 %v42
    %522 = vmatprep.subr.mxu0 0.0
    %523 = vmatpush1.msra.mxu0 %v43
    %524 = vmatprep.subr.mxu0 0.0
    %525 = vmatpush1.msra.mxu0 %v44
    %526 = vmatprep.subr.mxu0 0.0
    %527 = vmatpush1.msra.mxu0 %v45
    %528 = vmatprep.subr.mxu0 0.0
    %529 = vmatpush1.msra.mxu0 %v46
    %530 = vmatprep.subr.mxu0 0.0
    %531 = vmatpush1.msra.mxu0 %v47
    %532 = vmatprep.subr.mxu0 0.0
    %533 = vmatpush1.msra.mxu0 %v48
    %534 = vmatprep.subr.mxu0 0.0
    %535 = vmatpush1.msra.mxu0 %v49
    %536 = vmatprep.subr.mxu0 0.0
    %537 = vmatpush1.msra.mxu0 %v50
    %538 = vmatprep.subr.mxu0 0.0
    %539 = vmatpush1.msra.mxu0 %v51
    %540 = vmatprep.subr.mxu0 0.0
    %541 = vmatpush1.msra.mxu0 %v52
    %542 = vmatprep.subr.mxu0 0.0
    %543 = vmatpush1.msra.mxu0 0.0
    %544 = vmatprep.subr.mxu0 0.0
    %545 = vmatpush1.msra.mxu0 0.0
    %546 = vmatprep.subr.mxu0 0.0
    %547 = vmatpush1.msra.mxu0 0.0
    %548 = vmatprep.subr.mxu0 0.0
    %549 = vmatpush1.msra.mxu0 0.0
    %550 = vmatprep.subr.mxu0 0.0
    %551 = vmatpush1.msra.mxu0 0.0
    %552 = vmatprep.subr.mxu0 0.0
    %553 = vmatpush1.msra.mxu0 0.0
    %554 = vmatprep.subr.mxu0 0.0
    %555 = vmatpush1.msra.mxu0 0.0
    %556 = vmatprep.subr.mxu0 0.0
    %557 = vmatpush1.msra.mxu0 0.0
    %558 = vmatprep.subr.mxu0 0.0
    %559 = vmatpush1.msra.mxu0 0.0
    %560 = vmatprep.subr.mxu0 0.0
    %561 = vmatpush1.msra.mxu0 0.0
    %562 = vmatprep.subr.mxu0 0.0
    %563 = vmatpush1.msra.mxu0 0.0
    %564 = vmatprep.subr.mxu0 0.0
    %565 = vmatpush1.msra.mxu0 0.0
    %566 = vmatprep.subr.mxu0 0.0
    %567 = vmatpush1.msra.mxu0 0.0
    %568 = vmatprep.subr.mxu0 0.0
    %569 = vmatpush1.msra.mxu0 0.0
    %570 = vmatprep.subr.mxu0 0.0
    %571 = vmatpush1.msra.mxu0 0.0
    %572 = vmatprep.subr.mxu0 0.0
    %573 = vmatpush1.msra.mxu0 0.0
    %574 = vmatprep.mubr.f32.mxu0 0.0
    %575 = vmatmul.mubr.f32.gmra.mrb[0].mxu0 %v509
    %v576 = vpop.f32.mrb[0].mxu0
    %v577 = vadd.f32 0.0, %v576
    %v578 = vpop.f32.mrb[0].mxu0
    %579 = vdwg.mxu0
    %v580 = vadd.f32 %v74, %v577
    %v581 = vtanh.pop %v580
    %582 = vmatprep.subr.mxu0 0.0
    %583 = vmatpush1.msra.mxu0 %v37
    %584 = vmatprep.subr.mxu0 0.0
    %585 = vmatpush1.msra.mxu0 %v38
    %586 = vmatprep.subr.mxu0 0.0
    %587 = vmatpush1.msra.mxu0 %v39
    %588 = vmatprep.subr.mxu0 0.0
    %589 = vmatpush1.msra.mxu0 %v40
    %590 = vmatprep.subr.mxu0 0.0
    %591 = vmatpush1.msra.mxu0 %v41
    %592 = vmatprep.subr.mxu0 0.0
    %593 = vmatpush1.msra.mxu0 %v42
    %594 = vmatprep.subr.mxu0 0.0
    %595 = vmatpush1.msra.mxu0 %v43
    %596 = vmatprep.subr.mxu0 0.0
    %597 = vmatpush1.msra.mxu0 %v44
    %598 = vmatprep.subr.mxu0 0.0
    %599 = vmatpush1.msra.mxu0 %v45
    %600 = vmatprep.subr.mxu0 0.0
    %601 = vmatpush1.msra.mxu0 %v46
    %602 = vmatprep.subr.mxu0 0.0
    %603 = vmatpush1.msra.mxu0 %v47
    %604 = vmatprep.subr.mxu0 0.0
    %605 = vmatpush1.msra.mxu0 %v48
    %606 = vmatprep.subr.mxu0 0.0
    %607 = vmatpush1.msra.mxu0 %v49
    %608 = vmatprep.subr.mxu0 0.0
    %609 = vmatpush1.msra.mxu0 %v50
    %610 = vmatprep.subr.mxu0 0.0
    %611 = vmatpush1.msra.mxu0 %v51
    %612 = vmatprep.subr.mxu0 0.0
    %613 = vmatpush1.msra.mxu0 %v52
    %614 = vmatprep.subr.mxu0 0.0
    %615 = vmatpush1.msra.mxu0 0.0
    %616 = vmatprep.subr.mxu0 0.0
    %617 = vmatpush1.msra.mxu0 0.0
    %618 = vmatprep.subr.mxu0 0.0
    %619 = vmatpush1.msra.mxu0 0.0
    %620 = vmatprep.subr.mxu0 0.0
    %621 = vmatpush1.msra.mxu0 0.0
    %622 = vmatprep.subr.mxu0 0.0
    %623 = vmatpush1.msra.mxu0 0.0
    %624 = vmatprep.subr.mxu0 0.0
    %625 = vmatpush1.msra.mxu0 0.0
    %626 = vmatprep.subr.mxu0 0.0
    %627 = vmatpush1.msra.mxu0 0.0
    %628 = vmatprep.subr.mxu0 0.0
    %629 = vmatpush1.msra.mxu0 0.0
    %630 = vmatprep.subr.mxu0 0.0
    %631 = vmatpush1.msra.mxu0 0.0
    %632 = vmatprep.subr.mxu0 0.0
    %633 = vmatpush1.msra.mxu0 0.0
    %634 = vmatprep.subr.mxu0 0.0
    %635 = vmatpush1.msra.mxu0 0.0
    %636 = vmatprep.subr.mxu0 0.0
    %637 = vmatpush1.msra.mxu0 0.0
    %638 = vmatprep.subr.mxu0 0.0
    %639 = vmatpush1.msra.mxu0 0.0
    %640 = vmatprep.subr.mxu0 0.0
    %641 = vmatpush1.msra.mxu0 0.0
    %642 = vmatprep.subr.mxu0 0.0
    %643 = vmatpush1.msra.mxu0 0.0
    %644 = vmatprep.subr.mxu0 0.0
    %645 = vmatpush1.msra.mxu0 0.0
    %646 = vmatprep.mubr.f32.mxu0 0.0
    %647 = vmatmul.mubr.f32.gmra.mrb[0].mxu0 %v581
    %v648 = vpop.f32.mrb[0].mxu0
    %v649 = vadd.f32 0.0, %v648
    %v650 = vpop.f32.mrb[0].mxu0
    %651 = vdwg.mxu0
    %v652 = vadd.f32 %v77, %v649
    %v653 = vtanh.pop %v652
    %v655 = vrot.slane %v221, 7
    %v658 = vrot.slane %v293, 6
    %v661 = vrot.slane %v365, 5
    %v664 = vrot.slane %v437, 4
    %v667 = vrot.slane %v509, 3
    %v670 = vrot.slane %v581, 2
    %v673 = vrot.slane %v653, 1
    %vm675 = vcmask 1040384
    %v676 = vsel %vm675, %v149, %v655
    %vm677 = vcmask 1041408
    %v678 = vsel %vm677, %v676, %v658
    %vm679 = vcmask 1042432
    %v680 = vsel %vm679, %v678, %v661
    %vm681 = vcmask 1043456
    %v682 = vsel %vm681, %v680, %v664
    %vm683 = vcmask 1044480
    %v684 = vsel %vm683, %v682, %v667
    %vm685 = vcmask 1045504
    %v686 = vsel %vm685, %v684, %v670
    %vm687 = vcmask 1046528
    %v688 = vsel %vm687, %v686, %v673
    %v689 = vld [vmem:[#allocation6 + $0x90] sm:$0xff]
    %v690 = vld [vmem:[#allocation6 + $0x98] sm:$0xff]
    %v691 = vld [vmem:[#allocation6 + $0xa0] sm:$0xff]
    %v692 = vld [vmem:[#allocation6 + $0xa8] sm:$0xff]
    %v693 = vld [vmem:[#allocation6 + $0xb0] sm:$0xff]
    %v694 = vld [vmem:[#allocation6 + $0xb8] sm:$0xff]
    %v695 = vld [vmem:[#allocation6 + $0xc0] sm:$0xff]
    %v696 = vld [vmem:[#allocation6 + $0xc8] sm:$0xff]
    %v697 = vld [vmem:[#allocation6 + $0xd0] sm:$0xff]
    %v698 = vld [vmem:[#allocation6 + $0xd8] sm:$0xff]
    %v699 = vld [vmem:[#allocation6 + $0xe0] sm:$0xff]
    %v700 = vld [vmem:[#allocation6 + $0xe8] sm:$0xff]
    %v701 = vld [vmem:[#allocation6 + $0xf0] sm:$0xff]
    %v702 = vld [vmem:[#allocation6 + $0xf8] sm:$0xff]
    %v703 = vld [vmem:[#allocation6 + $0x100] sm:$0xff]
    %v704 = vld [vmem:[#allocation6 + $0x108] sm:$0xff]
    %v705 = vld [vmem:[#allocation6 + $0x110] sm:$0x1]
    %v706 = vlaneseq
    %v707 = vshrl.u32 %v706, 7
    %v708 = vsub.s32 0, %v707
    %v709 = vrot.slane %v705, %v708
    %710 = vmatprep.subr.mxu0 0.0
    %711 = vmatpush1.msra.mxu0 %v689
    %712 = vmatprep.subr.mxu0 0.0
    %713 = vmatpush1.msra.mxu0 %v690
    %714 = vmatprep.subr.mxu0 0.0
    %715 = vmatpush1.msra.mxu0 %v691
    %716 = vmatprep.subr.mxu0 0.0
    %717 = vmatpush1.msra.mxu0 %v692
    %718 = vmatprep.subr.mxu0 0.0
    %719 = vmatpush1.msra.mxu0 %v693
    %720 = vmatprep.subr.mxu0 0.0
    %721 = vmatpush1.msra.mxu0 %v694
    %722 = vmatprep.subr.mxu0 0.0
    %723 = vmatpush1.msra.mxu0 %v695
    %724 = vmatprep.subr.mxu0 0.0
    %725 = vmatpush1.msra.mxu0 %v696
    %726 = vmatprep.subr.mxu0 0.0
    %727 = vmatpush1.msra.mxu0 %v697
    %728 = vmatprep.subr.mxu0 0.0
    %729 = vmatpush1.msra.mxu0 %v698
    %730 = vmatprep.subr.mxu0 0.0
    %731 = vmatpush1.msra.mxu0 %v699
    %732 = vmatprep.subr.mxu0 0.0
    %733 = vmatpush1.msra.mxu0 %v700
    %734 = vmatprep.subr.mxu0 0.0
    %735 = vmatpush1.msra.mxu0 %v701
    %736 = vmatprep.subr.mxu0 0.0
    %737 = vmatpush1.msra.mxu0 %v702
    %738 = vmatprep.subr.mxu0 0.0
    %739 = vmatpush1.msra.mxu0 %v703
    %740 = vmatprep.subr.mxu0 0.0
    %741 = vmatpush1.msra.mxu0 %v704
    %742 = vmatprep.subr.mxu0 0.0
    %743 = vmatpush1.msra.mxu0 0.0
    %744 = vmatprep.subr.mxu0 0.0
    %745 = vmatpush1.msra.mxu0 0.0
    %746 = vmatprep.subr.mxu0 0.0
    %747 = vmatpush1.msra.mxu0 0.0
    %748 = vmatprep.subr.mxu0 0.0
    %749 = vmatpush1.msra.mxu0 0.0
    %750 = vmatprep.subr.mxu0 0.0
    %751 = vmatpush1.msra.mxu0 0.0
    %752 = vmatprep.subr.mxu0 0.0
    %753 = vmatpush1.msra.mxu0 0.0
    %754 = vmatprep.subr.mxu0 0.0
    %755 = vmatpush1.msra.mxu0 0.0
    %756 = vmatprep.subr.mxu0 0.0
    %757 = vmatpush1.msra.mxu0 0.0
    %758 = vmatprep.subr.mxu0 0.0
    %759 = vmatpush1.msra.mxu0 0.0
    %760 = vmatprep.subr.mxu0 0.0
    %761 = vmatpush1.msra.mxu0 0.0
    %762 = vmatprep.subr.mxu0 0.0
    %763 = vmatpush1.msra.mxu0 0.0
    %764 = vmatprep.subr.mxu0 0.0
    %765 = vmatpush1.msra.mxu0 0.0
    %766 = vmatprep.subr.mxu0 0.0
    %767 = vmatpush1.msra.mxu0 0.0
    %768 = vmatprep.subr.mxu0 0.0
    %769 = vmatpush1.msra.mxu0 0.0
    %770 = vmatprep.subr.mxu0 0.0
    %771 = vmatpush1.msra.mxu0 0.0
    %772 = vmatprep.subr.mxu0 0.0
    %773 = vmatpush1.msra.mxu0 0.0
    %774 = vmatprep.mubr.f32.mxu0 0.0
    %775 = vmatmul.mubr.f32.gmra.mrb[0].mxu0 %v688
    %v776 = vpop.f32.mrb[0].mxu0
    %v777 = vadd.f32 %v709, %v776
    %v778 = vpop.f32.mrb[0].mxu0
    %779 = vdwg.mxu0
    %v780 = vmax.f32 %v777, 0.0
    %781 = vst [vmem:[#allocation7] sm:$0xff] %v780
    // Predicated region
    $region18: #{tpu_custom_call.1} parent=1 // pred_check
      _
    $region19: #{tpu_custom_call.1} parent=1 // pred_check_branch
      %783 = sbr.rel (0) target = $region21
    $region20: #{tpu_custom_call.1} parent=1 // pred_region
      %s785 = ssub.s32 128, 128
      %786 = vsyncadd [#allocation4], %s785
      %s788 = sshll.u32 [#allocation7], 4
      %s789 = int_to_ptr.vmem [resolvable:$true] %s788
      %791 = dma.vmem_to_hbm [thread:$0]  %s789, 128, %s2, [#allocation4]
    $region21: #{tpu_custom_call.1} parent=1 // pred_fallthru
      _
    // Predicated region
    $region22: #{tpu_custom_call.1} parent=1 // pred_check
      _
    $region23: #{tpu_custom_call.1} parent=1 // pred_check_branch
      %793 = sbr.rel (0) target = $region25
    $region24: #{tpu_custom_call.1} parent=1 // pred_region
      %794 = dma.done [#allocation4], 128
    $region25: #{tpu_custom_call.1} parent=1 // pred_fallthru
      _
    %795 = vsyncpa [#allocation3], 1
    %796 = vsyncpa [#allocation4], 1
    %797 = vsyncpa [#allocation5], 1

</llo_original>
